<compile_context>
chip_gen: v5e
topology: v5e:2x2
jax: 0.10.0
libtpu: 0.0.40
codegen_flags: <defaults>
</compile_context>

<pallas_src>
import functools

import jax
import jax.numpy as jnp
from jax import lax
from jax.experimental import pallas as pl
from jax.experimental.pallas import tpu as pltpu

_VMEM_LIMIT = 32 * 1024 * 1024   # scoped VMEM requested from the compiler (ok on v5e/v6e/v7x)
_VMEM_BUDGET = 24 * 1024 * 1024  # target double-buffered working set


def _cdiv(a: int, b: int) -> int:
    return -(-a // b)


def _round_up(v: int, m: int) -> int:
    return _cdiv(v, m) * m


def _proto_kernel_f32(x_ref, w_ref, o_ref):
    """f32 output: accumulate straight into the VMEM-resident output block (no scratch)."""
    @pl.when(pl.program_id(2) == 0)
    def _():
        o_ref[...] = jnp.zeros_like(o_ref)

    # Contract the shared feat dim of x (tm, tk) and W (tn, tk): the MXU consumes W
    # row-major exactly as nn.Linear stores it — no `.T` / relayout in the kernel.
    o_ref[...] += lax.dot_general(
        x_ref[...],
        w_ref[...],
        dimension_numbers=(((1,), (1,)), ((), ())),
        preferred_element_type=jnp.float32,
    )


def _proto_kernel_acc(x_ref, w_ref, o_ref, acc_ref):
    """Non-f32 output: f32 scratch accumulator, cast back on the final k step."""
    @pl.when(pl.program_id(2) == 0)
    def _():
        acc_ref[...] = jnp.zeros_like(acc_ref)

    acc_ref[...] += lax.dot_general(
        x_ref[...],
        w_ref[...],
        dimension_numbers=(((1,), (1,)), ((), ())),
        preferred_element_type=jnp.float32,
    )

    @pl.when(pl.program_id(2) == pl.num_programs(2) - 1)
    def _():
        o_ref[...] = acc_ref[...].astype(o_ref.dtype)


def _select_tiles(B: int, P: int, F: int, itemsize: int, sub: int):
    # Full-dim blocks whenever a dim is modest: for the common prototypes shape
    # (F ~128-512, P a few thousand) W becomes one resident block (constant index_map,
    # DMA'd once) and the kernel is a single pass over x at HBM roofline.
    tm = B if B <= 512 else 512
    tn = P if P <= 2048 else 2048
    if F <= 2048:
        tk = F
    else:
        tk = _round_up(_cdiv(F, _cdiv(F, 2048)), 128)  # near-even K split, 128-aligned

    def footprint(tm_, tn_, tk_):
        # double-buffered x / W / out tiles + worst-case f32 accumulator
        return 2 * (tm_ * tk_ + tn_ * tk_ + tm_ * tn_) * itemsize + tm_ * tn_ * 4

    while footprint(tm, tn, tk) > _VMEM_BUDGET:
        if tn >= tk and tn > 256:
            tn = max(256, (tn // 2 // 128) * 128)      # keep output lane-dense (x128)
        elif tk > 256:
            tk = max(256, (tk // 2 // 128) * 128)
        elif tm > sub:
            tm = max(sub, (tm // 2 // sub) * sub)
        else:
            break

    # v7x has 2 TensorCores: expose >= 2 blocks on the "parallel" axes when the batch allows,
    # so dimension_semantics can shard the grid instead of idling one core.
    if _cdiv(B, tm) * _cdiv(P, tn) < 2 and B >= 2 * sub:
        tm = _round_up(_cdiv(B, 2), sub)

    return tm, tn, tk


def prototypes_forward(x: jax.Array, weight: jax.Array) -> jax.Array:
    """Equivalent of Prototypes.forward: x @ weight.T (no bias)."""
    assert x.ndim == 2 and weight.ndim == 2
    B, F = x.shape
    P, Fw = weight.shape
    assert F == Fw, "feat_dim mismatch"

    # Guard against silent mixed-precision promotion inside the dot.
    if x.dtype != weight.dtype:
        ct = jnp.promote_types(x.dtype, weight.dtype)
        x, weight = x.astype(ct), weight.astype(ct)
    out_dtype = x.dtype
    itemsize = jnp.dtype(out_dtype).itemsize
    sub = 16 if itemsize == 2 else 8

    tm, tn, tk = _select_tiles(B, P, F, itemsize, sub)

    # Zero-pad ONLY the contraction (feat) dim, and only when it is tiled: garbage in K
    # would corrupt the reduction.  Partial M/N boundary blocks are masked by Pallas on
    # writeback, so B and P are never padded (no extra HBM pad/slice passes).
    if F % tk != 0:
        Fp = _round_up(F, tk)
        x = jnp.pad(x, ((0, 0), (0, Fp - F)))
        weight = jnp.pad(weight, ((0, 0), (0, Fp - F)))
        F = Fp

    grid = (_cdiv(B, tm), _cdiv(P, tn), F // tk)

    f32_out = jnp.dtype(out_dtype) == jnp.dtype(jnp.float32)
    kernel = _proto_kernel_f32 if f32_out else _proto_kernel_acc
    scratch = [] if f32_out else [pltpu.VMEM((tm, tn), jnp.float32)]

    return pl.pallas_call(
        kernel,
        out_shape=jax.ShapeDtypeStruct((B, P), out_dtype),
        grid_spec=pltpu.PrefetchScalarGridSpec(
            num_scalar_prefetch=0,
            grid=grid,
            in_specs=[
                pl.BlockSpec((tm, tk), lambda i, j, k: (i, k)),  # x tile
                pl.BlockSpec((tn, tk), lambda i, j, k: (j, k)),  # W tile (row-major, as stored)
            ],
            out_specs=pl.BlockSpec((tm, tn), lambda i, j, k: (i, j)),
            scratch_shapes=scratch,
        ),
        compiler_params=pltpu.CompilerParams(
            dimension_semantics=("parallel", "parallel", "arbitrary"),
            vmem_limit_bytes=_VMEM_LIMIT,
        ),
        cost_estimate=pl.CostEstimate(
            flops=2 * B * P * F,
            transcendentals=0,
            bytes_accessed=(B * F + P * F + B * P) * itemsize,
        ),
    )(x, weight)


if __name__ == "__main__":
    # Small, deterministic example consistent with the module's forward.
    batch = 8
    feat_dim = 32
    num_prototypes = 16

    key = jax.random.PRNGKey(0)
    kx, kw = jax.random.split(key)
    x = jax.random.normal(kx, (batch, feat_dim), dtype=jnp.float32)
    # Deterministic init of the Linear weight (num_prototypes, feat_dim).
    weight = jax.random.normal(kw, (num_prototypes, feat_dim), dtype=jnp.float32) * 0.1

    out = jax.block_until_ready(prototypes_forward(x, weight))

    # Correctness check against plain-JAX reference of nn.Linear(bias=False).
    ref = x @ weight.T
    assert out.shape == (batch, num_prototypes)
    assert jnp.allclose(out, ref, atol=1e-5, rtol=1e-5)

    # TODO(synk): initialize_prototypes / normalize_prototypes are no_grad weight utilities,
    # not part of forward; they remain plain-JAX host-side ops if needed.
    print("KERNEL_OK")
</pallas_src>

<mosaic_0001>
module attributes {stable_mosaic.version = 11 : i64} {
  func.func @_proto_kernel_f32(%arg0: i32, %arg1: i32, %arg2: i32, %arg3: memref<8x32xf32, #tpu.memory_space<vmem>>, %arg4: memref<16x32xf32, #tpu.memory_space<vmem>>, %arg5: memref<8x16xf32, #tpu.memory_space<vmem>>) attributes {dimension_semantics = [#tpu.dimension_semantics<parallel>, #tpu.dimension_semantics<parallel>, #tpu.dimension_semantics<arbitrary>], iteration_bounds = array<i64: 1, 1, 1>, scalar_prefetch = 0 : i64, scratch_operands = 0 : i64, tpu.core_type = #tpu.core_type<tc>, window_params = [{transform_indices = @transform_0, window_bounds = array<i64: 8, 32>}, {transform_indices = @transform_1, window_bounds = array<i64: 16, 32>}, {transform_indices = @transform_2, window_bounds = array<i64: 8, 16>}]} {
    %c0_i32 = arith.constant 0 : i32
    %0 = arith.cmpi eq, %arg2, %c0_i32 : i32
    %1 = arith.extui %0 : i1 to i32
    %c0_i32_0 = arith.constant 0 : i32
    %2 = arith.cmpi ne, %1, %c0_i32_0 : i32
    scf.if %2 {
      %cst_8 = arith.constant 0.000000e+00 : f32
      %9 = vector.broadcast %cst_8 : f32 to vector<8x16xf32>
      %c0_9 = arith.constant 0 : index
      %c0_10 = arith.constant 0 : index
      %10 = vector.load %arg5[%c0_9, %c0_10] : memref<8x16xf32, #tpu.memory_space<vmem>>, vector<8x16xf32>
      tpu.vector_store %arg5[%c0_9, %c0_10], %9 {strides = array<i32>} : memref<8x16xf32, #tpu.memory_space<vmem>>, vector<8x16xf32>,
    } else {
    }
    %c0 = arith.constant 0 : index
    %c0_1 = arith.constant 0 : index
    %3 = vector.load %arg5[%c0, %c0_1] : memref<8x16xf32, #tpu.memory_space<vmem>>, vector<8x16xf32>
    %c0_2 = arith.constant 0 : index
    %c0_3 = arith.constant 0 : index
    %4 = vector.load %arg3[%c0_2, %c0_3] : memref<8x32xf32, #tpu.memory_space<vmem>>, vector<8x32xf32>
    %c0_4 = arith.constant 0 : index
    %c0_5 = arith.constant 0 : index
    %5 = vector.load %arg4[%c0_4, %c0_5] : memref<16x32xf32, #tpu.memory_space<vmem>>, vector<16x32xf32>
    %cst = arith.constant dense<0.000000e+00> : vector<8x16xf32>
    %6 = tpu.matmul %4, %5, %cst {dimension_numbers = #tpu.dot_dimension_numbers<[1], [1], [0], [0], [0, 0, 1, 0], [], []>} : vector<8x32xf32>, vector<16x32xf32>, vector<8x16xf32> -> vector<8x16xf32>
    %7 = arith.addf %3, %6 : vector<8x16xf32>
    %c0_6 = arith.constant 0 : index
    %c0_7 = arith.constant 0 : index
    %8 = vector.load %arg5[%c0_6, %c0_7] : memref<8x16xf32, #tpu.memory_space<vmem>>, vector<8x16xf32>
    tpu.vector_store %arg5[%c0_6, %c0_7], %7 {strides = array<i32>} : memref<8x16xf32, #tpu.memory_space<vmem>>, vector<8x16xf32>,
    return
  }
  func.func @transform_0(%arg0: i32, %arg1: i32, %arg2: i32) -> (i32, i32) {
    %c0_i32 = arith.constant 0 : i32
    return %arg0, %arg2 : i32, i32
  }
  func.func @transform_1(%arg0: i32, %arg1: i32, %arg2: i32) -> (i32, i32) {
    %c0_i32 = arith.constant 0 : i32
    return %arg1, %arg2 : i32, i32
  }
  func.func @transform_2(%arg0: i32, %arg1: i32, %arg2: i32) -> (i32, i32) {
    %c0_i32 = arith.constant 0 : i32
    return %arg0, %arg1 : i32, i32
  }
}

</mosaic_0001>

<llo_original>
// kernel: tpu_custom_call.1
$region0: #{tpu_custom_call.1}
  #allocation0 [shape = 'u32[]', space=smem, size = 0x4, offset = 0x4, fixed_abs, tag = 'smem constant byte address 0x4 - core index']
  #allocation1 [shape = 'u32[72,128]{1,0:T(1,128)}', space=vmem, size = 0x9000, scoped, tag = 'internal scratch']
  %s0 = inlined_call_operand.hbm [shape: f32[8,32], index: 0, kind: input, shape index: {}]
  %s1 = inlined_call_operand.hbm [shape: f32[16,32], index: 1, kind: input, shape index: {}]
  %s2 = inlined_call_operand.hbm [shape: f32[8,16], index: 2, kind: output, shape index: {}]
  %s3 = sld [smem:[#allocation0]]
  $region30: #{tpu_custom_call.1} parent=0
    _
  %s5 = ssub.s32 1, %s3
  %s6 = scalar_select 0, %s5, %s3
  $region1: #{tpu_custom_call.1} parent=0
    #allocation2 [shape = 'u8[4096]{0}', space=vmem, size = 0x1000, scoped, tag = 'input window, operand 0, single buffered']
    #allocation3 [shape = 's32[1]{0}', space=sflag, size = 0x4, scoped, tag = 'scoped memory for tpu_custom_call.1']
    #allocation4 [shape = 's32[1]{0}', space=sflag, size = 0x4, scoped, tag = 'scoped memory for tpu_custom_call.1']
    #allocation5 [shape = 'u8[8192]{0}', space=vmem, size = 0x2000, scoped, tag = 'input window, operand 1, single buffered']
    #allocation6 [shape = 's32[1]{0}', space=sflag, size = 0x4, scoped, tag = 'scoped memory for tpu_custom_call.1']
    #allocation7 [shape = 'u8[4096]{0}', space=vmem, size = 0x1000, scoped, tag = 'output window, operand 0, single buffered']
    %7 = vsyncpa [#allocation3], 0
    %8 = vsyncpa [#allocation6], 0
    %9 = vsyncpa [#allocation4], 0
    // Predicated region
    $region2: #{tpu_custom_call.1} parent=1 // pred_check
      _
    $region3: #{tpu_custom_call.1} parent=1 // pred_check_branch
      %11 = sbr.rel (0) target = $region5
    $region4: #{tpu_custom_call.1} parent=1 // pred_region
      %13 = vsyncadd [#allocation3], 0
      %s15 = sshll.u32 %s0, 4
      %s16 = int_to_ptr.hbm [resolvable:$true] %s15
      %s17 = sshll.u32 [#allocation2], 4
      %s18 = int_to_ptr.vmem [resolvable:$true] %s17
      %20 = dma.hbm_to_vmem [thread:$0]  %s16, 128, %s18, [#allocation3]
    $region5: #{tpu_custom_call.1} parent=1 // pred_fallthru
      _
    // Predicated region
    $region6: #{tpu_custom_call.1} parent=1 // pred_check
      _
    $region7: #{tpu_custom_call.1} parent=1 // pred_check_branch
      %22 = sbr.rel (0) target = $region9
    $region8: #{tpu_custom_call.1} parent=1 // pred_region
      %24 = vsyncadd [#allocation6], 0
      %s25 = sshll.u32 %s1, 4
      %s26 = int_to_ptr.hbm [resolvable:$true] %s25
      %s27 = sshll.u32 [#allocation5], 4
      %s28 = int_to_ptr.vmem [resolvable:$true] %s27
      %33 = dma.hbm_to_vmem [thread:$0]  %s26, 256, %s28, [#allocation6], 128, 128, 8
    $region9: #{tpu_custom_call.1} parent=1 // pred_fallthru
      _
    // Predicated region
    $region10: #{tpu_custom_call.1} parent=1 // pred_check
      _
    $region11: #{tpu_custom_call.1} parent=1 // pred_check_branch
      %35 = sbr.rel (0) target = $region13
    $region12: #{tpu_custom_call.1} parent=1 // pred_region
      %37 = dma.done [#allocation3], 128
    $region13: #{tpu_custom_call.1} parent=1 // pred_fallthru
      _
    // Predicated region
    $region14: #{tpu_custom_call.1} parent=1 // pred_check
      _
    $region15: #{tpu_custom_call.1} parent=1 // pred_check_branch
      %39 = sbr.rel (0) target = $region17
    $region16: #{tpu_custom_call.1} parent=1 // pred_region
      %41 = dma.done [#allocation6], 256
    $region17: #{tpu_custom_call.1} parent=1 // pred_fallthru
      _
    %p42 = scmp.eq.s32.totalorder 0, 0
    // Predicated region
    $region18: #{tpu_custom_call.1} parent=1 // pred_check
      %p43 = pneg %p42
    $region19: #{tpu_custom_call.1} parent=1 // pred_check_branch
      %45 = sbr.rel (%p43) target = $region21
    $region20: #{tpu_custom_call.1} parent=1 // pred_region
      %vm46 = vcmask 130048
      %47 = vst.msk [vmem:[#allocation7] sm:$0xff] %vm46, 0.0
    $region21: #{tpu_custom_call.1} parent=1 // pred_fallthru
      _
    %v48 = vld [vmem:[#allocation7] sm:$0xff]
    %v49 = vld [vmem:[#allocation2] sm:$0xff]
    %v50 = vld [vmem:[#allocation5] sm:$0xff]
    %v51 = vld [vmem:[#allocation5 + $0x8] sm:$0xff]
    %vm52 = vcmask 261120
    %v54 = vsel %vm52, %v49, 0
    %v57 = vsel %vm52, %v50, 0
    %v60 = vsel %vm52, %v51, 0
    %62 = vmatpush.xpose.msra.mxu0 0.0
    %63 = vmatpush.xpose.msra.mxu0 0.0
    %64 = vmatpush.xpose.msra.mxu0 0.0
    %65 = vmatpush.xpose.msra.mxu0 0.0
    %66 = vmatpush.xpose.msra.mxu0 0.0
    %67 = vmatpush.xpose.msra.mxu0 0.0
    %68 = vmatpush.xpose.msra.mxu0 0.0
    %69 = vmatpush.xpose.msra.mxu0 0.0
    %70 = vmatpush.xpose.msra.mxu0 0.0
    %71 = vmatpush.xpose.msra.mxu0 0.0
    %72 = vmatpush.xpose.msra.mxu0 0.0
    %73 = vmatpush.xpose.msra.mxu0 0.0
    %74 = vmatpush.xpose.msra.mxu0 0.0
    %75 = vmatpush.xpose.msra.mxu0 0.0
    %76 = vmatpush.xpose.msra.mxu0 %v60
    %77 = vmatpush.xpose.msra.mxu0 %v57
    %78 = vmatmul.f32.gmra.mxu0 %v54
    %v79 = vpop.f32.mrf.mxu0
    %v80 = vadd.f32 0.0, %v79
    %81 = vdwg.mxu0
    %v82 = vadd.f32 %v48, %v80
    %vm83 = vcmask 130048
    %84 = vst.msk [vmem:[#allocation7] sm:$0xff] %vm83, %v82
    // Predicated region
    $region22: #{tpu_custom_call.1} parent=1 // pred_check
      _
    $region23: #{tpu_custom_call.1} parent=1 // pred_check_branch
      %86 = sbr.rel (0) target = $region25
    $region24: #{tpu_custom_call.1} parent=1 // pred_region
      %88 = vsyncadd [#allocation4], 0
      %s90 = sshll.u32 [#allocation7], 4
      %s91 = int_to_ptr.vmem [resolvable:$true] %s90
      %s92 = sshll.u32 %s2, 4
      %s93 = int_to_ptr.hbm [resolvable:$true] %s92
      %95 = dma.vmem_to_hbm [thread:$0]  %s91, 128, %s93, [#allocation4]
    $region25: #{tpu_custom_call.1} parent=1 // pred_fallthru
      _
    // Predicated region
    $region26: #{tpu_custom_call.1} parent=1 // pred_check
      _
    $region27: #{tpu_custom_call.1} parent=1 // pred_check_branch
      %97 = sbr.rel (0) target = $region29
    $region28: #{tpu_custom_call.1} parent=1 // pred_region
      %99 = dma.done [#allocation4], 128
    $region29: #{tpu_custom_call.1} parent=1 // pred_fallthru
      _
    %100 = vsyncpa [#allocation3], 1
    %101 = vsyncpa [#allocation6], 1
    %102 = vsyncpa [#allocation4], 1

</llo_original>
